<compile_context>
chip_gen: v6e
topology: v6e:2x2x1
jax: 0.10.0
libtpu: 0.0.40
codegen_flags: <defaults>
</compile_context>

<pallas_src>
import jax
import jax.numpy as jnp
from jax.experimental import pallas as pl
from jax.experimental.pallas import tpu as pltpu


# ---------------------------------------------------------------------------
# Deterministic parameter init (mirrors nn.Parameter(zeros) + trunc_normal_)
# ---------------------------------------------------------------------------
def init_coop_prompt(key, prompt_length, prompt_channel, std=0.02):
    # truncated normal in [-2*std, 2*std] (close to timm's trunc_normal_);
    # parameter is unused in forward, so this has no runtime effect.
    vals = jax.random.truncated_normal(
        key, lower=-2.0, upper=2.0, shape=(1, prompt_length, prompt_channel),
        dtype=jnp.float32,
    )
    return vals * std


# ---------------------------------------------------------------------------
# Pallas kernel: identity copy over a lane-dense 2D slab
# ---------------------------------------------------------------------------
_LANES = 128
# ~2 MiB f32 tile (4096 x 128 x 4 B). With input+output double buffers that is
# 4 x 2 MiB = 8 MiB of VMEM -> safe on v7x (32 MiB default scoped / 64 MiB
# physical) as well as v5e/v6e.
_MAX_BLOCK_ROWS = 4096


def _copy_kernel(x_ref, o_ref):
    o_ref[...] = x_ref[...]


def _identity_pallas_2d(x2):
    """Identity copy of a 2D array with lane-dense, (8,128)-friendly tiling."""
    rows, lanes = x2.shape
    if rows <= _MAX_BLOCK_ROWS:
        block_rows = rows              # full extent: always layout-legal
    else:
        block_rows = _MAX_BLOCK_ROWS   # multiple of 8 -> unmasked stores
    grid = (pl.cdiv(rows, block_rows),)
    nbytes = x2.size * x2.dtype.itemsize

    return pl.pallas_call(
        _copy_kernel,
        out_shape=jax.ShapeDtypeStruct((rows, lanes), x2.dtype),
        grid=grid,
        in_specs=[pl.BlockSpec((block_rows, lanes), lambda i: (i, 0))],
        out_specs=pl.BlockSpec((block_rows, lanes), lambda i: (i, 0)),
        input_output_aliases={0: 0},
        cost_estimate=pl.CostEstimate(
            flops=0, transcendentals=0, bytes_accessed=2 * nbytes),
        compiler_params=pltpu.CompilerParams(
            dimension_semantics=("parallel",)),
    )(x2)


@jax.jit
def coop_forward(x):
    """CoOpModule.forward — identity, executed as a Pallas TPU kernel."""
    total = x.size
    if total % _LANES == 0:
        # Lane-dense layout: (B*S*C/128, 128), large aligned tiles.
        rows = total // _LANES
        y2 = _identity_pallas_2d(x.reshape(rows, _LANES))
    else:
        # Fallback for non-lane-aligned element counts: single full-array block.
        y2 = _identity_pallas_2d(x.reshape(1, total))
    return y2.reshape(x.shape)


class CoOpModuleJAX:
    """Synthetic JAX/Pallas port of CoOpModule."""

    def __init__(self, prompt_length, prompt_channel, use_prompt=False,
                 prompt=None, key=None):
        self.prompt_length = prompt_length
        self.prompt_channel = prompt_channel
        if use_prompt:
            self.coop_prompt = prompt
        else:
            if key is None:
                key = jax.random.PRNGKey(0)
            self.coop_prompt = init_coop_prompt(key, prompt_length, prompt_channel)

    def __call__(self, x):
        return coop_forward(x)


if __name__ == "__main__":
    key = jax.random.PRNGKey(0)
    k_param, k_x = jax.random.split(key)

    prompt_length = 8
    prompt_channel = 32

    module = CoOpModuleJAX(prompt_length, prompt_channel, key=k_param)

    # Small deterministic input: (batch, seq, hidden)
    x = jax.random.normal(k_x, (2, prompt_length, prompt_channel), dtype=jnp.float32)

    out = module(x)
    out = jax.block_until_ready(out)

    assert out.shape == x.shape
    assert out.dtype == x.dtype
    assert bool(jnp.allclose(out, x)), "identity forward mismatch"

    print("KERNEL_OK")
</pallas_src>

<mosaic_0001>
module attributes {stable_mosaic.version = 11 : i64} {
  func.func @_copy_kernel(%arg0: i32, %arg1: memref<4x128xf32, #tpu.memory_space<vmem>>, %arg2: memref<4x128xf32, #tpu.memory_space<vmem>>) attributes {dimension_semantics = [#tpu.dimension_semantics<parallel>], iteration_bounds = array<i64: 1>, scalar_prefetch = 0 : i64, scratch_operands = 0 : i64, tpu.core_type = #tpu.core_type<tc>, window_params = [{transform_indices = @transform_0, window_bounds = array<i64: 4, 128>}, {transform_indices = @transform_1, window_bounds = array<i64: 4, 128>}]} {
    %c0 = arith.constant 0 : index
    %c0_0 = arith.constant 0 : index
    %0 = vector.load %arg1[%c0, %c0_0] : memref<4x128xf32, #tpu.memory_space<vmem>>, vector<4x128xf32>
    %c0_1 = arith.constant 0 : index
    %c0_2 = arith.constant 0 : index
    %1 = vector.load %arg2[%c0_1, %c0_2] : memref<4x128xf32, #tpu.memory_space<vmem>>, vector<4x128xf32>
    tpu.vector_store %arg2[%c0_1, %c0_2], %0 {strides = array<i32>} : memref<4x128xf32, #tpu.memory_space<vmem>>, vector<4x128xf32>,
    return
  }
  func.func @transform_0(%arg0: i32) -> (i32, i32) {
    %c0_i32 = arith.constant 0 : i32
    %c0_i32_0 = arith.constant 0 : i32
    return %arg0, %c0_i32 : i32, i32
  }
  func.func @transform_1(%arg0: i32) -> (i32, i32) {
    %c0_i32 = arith.constant 0 : i32
    %c0_i32_0 = arith.constant 0 : i32
    return %arg0, %c0_i32 : i32, i32
  }
}

</mosaic_0001>

<llo_original>
// kernel: coop_forward.1
$region0: #{coop_forward.1}
  #allocation0 [shape = 'u32[]', space=smem, size = 0x4, offset = 0x4, fixed_abs, tag = 'smem constant byte address 0x4 - core index']
  #allocation1 [shape = 'u32[144,128]{1,0:T(1,128)}', space=vmem, size = 0x12000, scoped, tag = 'internal scratch']
  %s0 = inlined_call_operand.vmem [shape: f32[4,128], index: 0, kind: input, shape index: {}, may-alias: {0,1}]
  %s1 = inlined_call_operand.vmem [shape: f32[4,128], index: 1, kind: output, shape index: {}, may-alias: {0,1}]
  %s2 = sld [smem:[#allocation0]]
  $region14: #{coop_forward.1} parent=0
    _
  %s4 = ssub.s32 1, %s2
  %s5 = scalar_select 0, %s4, %s2
  // Predicated region
  $region2: #{coop_forward.1} parent=0 // pred_check
    _
  $region3: #{coop_forward.1} parent=0 // pred_check_branch
    %7 = sbr.rel (0) target = $region5
  $region4: #{coop_forward.1} parent=0 // pred_region
    _
  $region5: #{coop_forward.1} parent=0 // pred_fallthru
    _
  %v8 = vld [vmem:[%s0] sm:$0xf]
  %9 = vst [vmem:[%s1] sm:$0xf] %v8
  // Predicated region
  $region6: #{coop_forward.1} parent=0 // pred_check
    _
  $region7: #{coop_forward.1} parent=0 // pred_check_branch
    %11 = sbr.rel (0) target = $region9
  $region8: #{coop_forward.1} parent=0 // pred_region
    _
  $region9: #{coop_forward.1} parent=0 // pred_fallthru
    _
  // Predicated region
  $region10: #{coop_forward.1} parent=0 // pred_check
    _
  $region11: #{coop_forward.1} parent=0 // pred_check_branch
    %13 = sbr.rel (0) target = $region13
  $region12: #{coop_forward.1} parent=0 // pred_region
    _
  $region13: #{coop_forward.1} parent=0 // pred_fallthru
    _

</llo_original>
